<compile_context>
chip_gen: v5e
topology: v5e:2x2
jax: 0.10.0
libtpu: 0.0.40
codegen_flags: <defaults>
</compile_context>

<pallas_src>
import math

import jax
import jax.numpy as jnp
from jax.experimental import pallas as pl
from jax.experimental.pallas import tpu as pltpu


def _round_up(x, m):
    return ((x + m - 1) // m) * m


def _vmem_capacity_bytes():
    """Physical VMEM per core; conservative 64 MiB fallback (v7x) if query fails."""
    try:
        return int(pltpu.get_tpu_info().vmem_capacity_bytes)
    except Exception:
        return 64 << 20


# ------------------------------ kernels ------------------------------------ #

def _ff_kernel_single(x_ref, w1_ref, b1_ref, w2_ref, b2_ref, o_ref):
    # Whole hidden dim in one tile: no accumulator needed.
    x = x_ref[...].astype(jnp.bfloat16)                       # VPU cast, hidden under MXU
    h = jnp.dot(x, w1_ref[...], preferred_element_type=jnp.float32)
    h = jnp.maximum(h + b1_ref[...], 0.0)                     # f32 bias + ReLU (VPU)
    y = jnp.dot(h.astype(w2_ref.dtype), w2_ref[...],
                preferred_element_type=jnp.float32)
    o_ref[...] = (y + b2_ref[...]).astype(o_ref.dtype)


def _ff_kernel_acc(x_ref, w1_ref, b1_ref, w2_ref, b2_ref, o_ref, acc_ref):
    # Hidden dim tiled along grid axis 1; f32 accumulator resident across it.
    j = pl.program_id(1)

    @pl.when(j == 0)
    def _():
        acc_ref[...] = jnp.zeros_like(acc_ref)

    x = x_ref[...].astype(jnp.bfloat16)
    h = jnp.dot(x, w1_ref[...], preferred_element_type=jnp.float32)
    h = jnp.maximum(h + b1_ref[...], 0.0)
    acc_ref[...] += jnp.dot(h.astype(w2_ref.dtype), w2_ref[...],
                            preferred_element_type=jnp.float32)

    @pl.when(j == pl.num_programs(1) - 1)
    def _():
        o_ref[...] = (acc_ref[...] + b2_ref[...]).astype(o_ref.dtype)


# --------------------------- parameter prep -------------------------------- #

def prepare_params(w1_t, b1, w2_t, b2, *, th=1024):
    """One-time pad + bf16 cast of weights (call once, reuse across forward calls).

    w1_t: (n_embd, hidden), w2_t: (hidden, n_embd)  — already transposed vs PyTorch.
    Picks a hidden tile th_eff (multiple of 128) with minimal padding waste and
    keeps the double-buffered weight tiles under ~35% of VMEM capacity.
    """
    n_embd, hidden = w1_t.shape
    n_pad = _round_up(n_embd, 128)

    # VMEM-aware cap on the hidden tile (2x double-buffered bf16 W1+W2 tiles).
    cap = _vmem_capacity_bytes()
    max_th = max(128, ((int(cap * 0.35) // (8 * n_pad)) // 128) * 128)
    th = max(128, min(th, max_th))

    hid128 = _round_up(hidden, 128)
    if hid128 <= th:
        nj, th_eff = 1, hid128                      # single hidden tile (fast path)
    else:
        nj = pl.cdiv(hid128, th)
        th_eff = _round_up(-(-hid128 // nj), 128)   # minimal-waste tile (<=128 cols pad)
    hid_pad = nj * th_eff

    f32 = jnp.float32
    w1p = jnp.pad(w1_t, ((0, n_pad - n_embd), (0, hid_pad - hidden))).astype(jnp.bfloat16)
    w2p = jnp.pad(w2_t, ((0, hid_pad - hidden), (0, n_pad - n_embd))).astype(jnp.bfloat16)
    b1p = jnp.pad(b1.astype(f32), (0, hid_pad - hidden)).reshape(1, hid_pad)
    b2p = jnp.pad(b2.astype(f32), (0, n_pad - n_embd)).reshape(1, n_pad)
    return dict(w1=w1p, b1=b1p, w2=w2p, b2=b2p,
                n_embd=n_embd, hidden=hidden, n_pad=n_pad,
                hid_pad=hid_pad, th=th_eff)


# ------------------------------ forward ------------------------------------ #

def feed_forward(x, params, *, tm=512):
    """x: (B, T, n_embd); params: output of prepare_params."""
    B, T, n_embd = x.shape
    assert n_embd == params["n_embd"]
    n_pad, hid_pad, th_eff = params["n_pad"], params["hid_pad"], params["th"]
    out_dtype = x.dtype
    M = B * T
    M8 = _round_up(max(M, 1), 8)

    single = (hid_pad == th_eff)
    xb = jnp.dtype(x.dtype).itemsize
    ob = jnp.dtype(out_dtype).itemsize
    cap = _vmem_capacity_bytes()

    def row_tiling(target):
        if M8 <= target:
            return M8, 1
        gm = pl.cdiv(M8, target)
        te = _round_up(-(-M8 // gm), 8)             # minimal waste: <= 8*gm extra rows
        return te, gm

    def vmem_need(tm_e):
        need = (2 * tm_e * n_pad * xb               # x tiles (double-buffered)
                + 2 * n_pad * th_eff * 2            # W1 tiles (bf16)
                + 2 * th_eff * n_pad * 2            # W2 tiles (bf16)
                + 2 * (th_eff + n_pad) * 4          # biases
                + 2 * tm_e * n_pad * ob)            # output tiles
        if not single:
            need += tm_e * n_pad * 4                # f32 accumulator scratch
        return need

    tm_eff, grid_m = row_tiling(tm)
    # Shrink the row tile until the working set fits in ~half of physical VMEM
    # (generation-aware: 64 MiB on v7x, 128 MiB on v5e/v6e).
    while vmem_need(tm_eff) > cap // 2 and tm_eff > 64:
        tm_eff, grid_m = row_tiling(max(64, tm_eff // 2))
    M_pad = grid_m * tm_eff

    need = vmem_need(tm_eff)
    vmem_limit = max(int(need * 1.4) + (2 << 20), 32 << 20)
    vmem_limit = min(vmem_limit, cap - (4 << 20))   # never request above physical VMEM

    # x: pad only (no wrapper dtype cast — the kernel casts to bf16 on the VPU).
    x2d = x.reshape(M, n_embd)
    if M_pad != M or n_pad != n_embd:
        x2d = jnp.pad(x2d, ((0, M_pad - M), (0, n_pad - n_embd)))

    grid_j = hid_pad // th_eff
    flops = 4 * M_pad * n_pad * hid_pad
    bytes_accessed = (grid_j * M_pad * n_pad * xb
                      + grid_m * 2 * n_pad * hid_pad * 2
                      + (hid_pad + n_pad) * 4
                      + M_pad * n_pad * ob)
    cost = pl.CostEstimate(flops=flops, transcendentals=0,
                           bytes_accessed=bytes_accessed)

    if single:
        # Fast path: one hidden tile -> no accumulator scratch, 1-D grid.
        out2d = pl.pallas_call(
            _ff_kernel_single,
            out_shape=jax.ShapeDtypeStruct((M_pad, n_pad), out_dtype),
            grid_spec=pltpu.PrefetchScalarGridSpec(
                num_scalar_prefetch=0,
                grid=(grid_m,),
                in_specs=[
                    pl.BlockSpec((tm_eff, n_pad), lambda i: (i, 0)),
                    pl.BlockSpec((n_pad, hid_pad), lambda i: (0, 0)),
                    pl.BlockSpec((1, hid_pad), lambda i: (0, 0)),
                    pl.BlockSpec((hid_pad, n_pad), lambda i: (0, 0)),
                    pl.BlockSpec((1, n_pad), lambda i: (0, 0)),
                ],
                out_specs=pl.BlockSpec((tm_eff, n_pad), lambda i: (i, 0)),
            ),
            compiler_params=pltpu.CompilerParams(
                dimension_semantics=("parallel",),
                vmem_limit_bytes=vmem_limit,
            ),
            cost_estimate=cost,
        )(x2d, params["w1"], params["b1"], params["w2"], params["b2"])
    else:
        out2d = pl.pallas_call(
            _ff_kernel_acc,
            out_shape=jax.ShapeDtypeStruct((M_pad, n_pad), out_dtype),
            grid_spec=pltpu.PrefetchScalarGridSpec(
                num_scalar_prefetch=0,
                grid=(grid_m, grid_j),
                in_specs=[
                    pl.BlockSpec((tm_eff, n_pad), lambda i, j: (i, 0)),
                    pl.BlockSpec((n_pad, th_eff), lambda i, j: (0, j)),
                    pl.BlockSpec((1, th_eff), lambda i, j: (0, j)),
                    pl.BlockSpec((th_eff, n_pad), lambda i, j: (j, 0)),
                    pl.BlockSpec((1, n_pad), lambda i, j: (0, 0)),
                ],
                out_specs=pl.BlockSpec((tm_eff, n_pad), lambda i, j: (i, 0)),
                scratch_shapes=[pltpu.VMEM((tm_eff, n_pad), jnp.float32)],
            ),
            compiler_params=pltpu.CompilerParams(
                dimension_semantics=("parallel", "arbitrary"),
                vmem_limit_bytes=vmem_limit,
            ),
            cost_estimate=cost,
        )(x2d, params["w1"], params["b1"], params["w2"], params["b2"])

    return out2d[:M, :n_embd].reshape(B, T, n_embd)


# ------------------------------ init / test -------------------------------- #

def init_params(key, n_embd):
    """PyTorch nn.Linear-style init (uniform +/- 1/sqrt(fan_in)); weights stored (in, out)."""
    hidden = 4 * n_embd
    k1, k2, k3, k4 = jax.random.split(key, 4)
    b1_bound = 1.0 / math.sqrt(n_embd)
    b2_bound = 1.0 / math.sqrt(hidden)
    w1_t = jax.random.uniform(k1, (n_embd, hidden), jnp.float32, -b1_bound, b1_bound)
    b1 = jax.random.uniform(k2, (hidden,), jnp.float32, -b1_bound, b1_bound)
    w2_t = jax.random.uniform(k3, (hidden, n_embd), jnp.float32, -b2_bound, b2_bound)
    b2 = jax.random.uniform(k4, (n_embd,), jnp.float32, -b2_bound, b2_bound)
    return w1_t, b1, w2_t, b2


def _reference(x, w1_t, b1, w2_t, b2):
    B, T, n_embd = x.shape
    y = jnp.maximum(x.reshape(-1, n_embd) @ w1_t + b1, 0.0) @ w2_t + b2
    return y.reshape(B, T, n_embd)


if __name__ == "__main__":
    key = jax.random.PRNGKey(0)

    # --- test 1: n_embd=32 (hidden=128) -> single-hidden-tile fast path ---
    n_embd, B, T = 32, 2, 8
    kx, kp, key = jax.random.split(key, 3)
    x = jax.random.normal(kx, (B, T, n_embd), jnp.float32)
    w1_t, b1, w2_t, b2 = init_params(kp, n_embd)
    params = prepare_params(w1_t, b1, w2_t, b2)        # one-time pad + bf16 cast
    out = jax.block_until_ready(feed_forward(x, params))
    ref = _reference(x, w1_t, b1, w2_t, b2)
    assert out.shape == (B, T, n_embd)
    assert jnp.allclose(out, ref, atol=5e-2, rtol=5e-2), \
        float(jnp.max(jnp.abs(out - ref)))

    # --- test 2: n_embd=64 (hidden=256) with th=128 -> accumulating path ---
    n_embd2 = 64
    kx2, kp2 = jax.random.split(key)
    x2 = jax.random.normal(kx2, (B, T, n_embd2), jnp.float32)
    w1_t2, b1_2, w2_t2, b2_2 = init_params(kp2, n_embd2)
    params2 = prepare_params(w1_t2, b1_2, w2_t2, b2_2, th=128)
    out2 = jax.block_until_ready(feed_forward(x2, params2))
    ref2 = _reference(x2, w1_t2, b1_2, w2_t2, b2_2)
    assert out2.shape == (B, T, n_embd2)
    assert jnp.allclose(out2, ref2, atol=5e-2, rtol=5e-2), \
        float(jnp.max(jnp.abs(out2 - ref2)))

    print("KERNEL_OK")
</pallas_src>

<mosaic_0001>
module attributes {stable_mosaic.version = 11 : i64} {
  func.func @_ff_kernel_single(%arg0: i32, %arg1: memref<16x128xf32, #tpu.memory_space<vmem>>, %arg2: memref<128x128xbf16, #tpu.memory_space<vmem>>, %arg3: memref<1x128xf32, #tpu.memory_space<vmem>>, %arg4: memref<128x128xbf16, #tpu.memory_space<vmem>>, %arg5: memref<1x128xf32, #tpu.memory_space<vmem>>, %arg6: memref<16x128xf32, #tpu.memory_space<vmem>>) attributes {dimension_semantics = [#tpu.dimension_semantics<parallel>], iteration_bounds = array<i64: 1>, scalar_prefetch = 0 : i64, scratch_operands = 0 : i64, tpu.core_type = #tpu.core_type<tc>, window_params = [{transform_indices = @transform_0, window_bounds = array<i64: 16, 128>}, {pipeline_mode = #tpu.pipeline_mode<synchronous>, transform_indices = @transform_1, window_bounds = array<i64: 128, 128>}, {pipeline_mode = #tpu.pipeline_mode<synchronous>, transform_indices = @transform_2, window_bounds = array<i64: 1, 128>}, {pipeline_mode = #tpu.pipeline_mode<synchronous>, transform_indices = @transform_3, window_bounds = array<i64: 128, 128>}, {pipeline_mode = #tpu.pipeline_mode<synchronous>, transform_indices = @transform_4, window_bounds = array<i64: 1, 128>}, {transform_indices = @transform_5, window_bounds = array<i64: 16, 128>}]} {
    %c0 = arith.constant 0 : index
    %c0_0 = arith.constant 0 : index
    %0 = vector.load %arg1[%c0, %c0_0] : memref<16x128xf32, #tpu.memory_space<vmem>>, vector<16x128xf32>
    %1 = arith.truncf %0 : vector<16x128xf32> to vector<16x128xbf16>
    %c0_1 = arith.constant 0 : index
    %c0_2 = arith.constant 0 : index
    %2 = vector.load %arg2[%c0_1, %c0_2] : memref<128x128xbf16, #tpu.memory_space<vmem>>, vector<128x128xbf16>
    %cst = arith.constant dense<0.000000e+00> : vector<16x128xf32>
    %3 = tpu.matmul %1, %2, %cst {dimension_numbers = #tpu.dot_dimension_numbers<[1], [0], [0], [1], [0, 0, 1, 1], [], []>} : vector<16x128xbf16>, vector<128x128xbf16>, vector<16x128xf32> -> vector<16x128xf32>
    %c0_3 = arith.constant 0 : index
    %c0_4 = arith.constant 0 : index
    %4 = vector.load %arg3[%c0_3, %c0_4] : memref<1x128xf32, #tpu.memory_space<vmem>>, vector<1x128xf32>
    %5 = vector.broadcast %4 : vector<1x128xf32> to vector<16x128xf32>
    %6 = arith.addf %3, %5 : vector<16x128xf32>
    %cst_5 = arith.constant 0.000000e+00 : f32
    %7 = vector.broadcast %cst_5 : f32 to vector<16x128xf32>
    %8 = arith.maximumf %6, %7 : vector<16x128xf32>
    %9 = arith.truncf %8 : vector<16x128xf32> to vector<16x128xbf16>
    %c0_6 = arith.constant 0 : index
    %c0_7 = arith.constant 0 : index
    %10 = vector.load %arg4[%c0_6, %c0_7] : memref<128x128xbf16, #tpu.memory_space<vmem>>, vector<128x128xbf16>
    %cst_8 = arith.constant dense<0.000000e+00> : vector<16x128xf32>
    %11 = tpu.matmul %9, %10, %cst_8 {dimension_numbers = #tpu.dot_dimension_numbers<[1], [0], [0], [1], [0, 0, 1, 1], [], []>} : vector<16x128xbf16>, vector<128x128xbf16>, vector<16x128xf32> -> vector<16x128xf32>
    %c0_9 = arith.constant 0 : index
    %c0_10 = arith.constant 0 : index
    %12 = vector.load %arg5[%c0_9, %c0_10] : memref<1x128xf32, #tpu.memory_space<vmem>>, vector<1x128xf32>
    %13 = vector.broadcast %12 : vector<1x128xf32> to vector<16x128xf32>
    %14 = arith.addf %11, %13 : vector<16x128xf32>
    %c0_11 = arith.constant 0 : index
    %c0_12 = arith.constant 0 : index
    %15 = vector.load %arg6[%c0_11, %c0_12] : memref<16x128xf32, #tpu.memory_space<vmem>>, vector<16x128xf32>
    tpu.vector_store %arg6[%c0_11, %c0_12], %14 {strides = array<i32>} : memref<16x128xf32, #tpu.memory_space<vmem>>, vector<16x128xf32>,
    return
  }
  func.func @transform_0(%arg0: i32) -> (i32, i32) {
    %c0_i32 = arith.constant 0 : i32
    %c0_i32_0 = arith.constant 0 : i32
    return %arg0, %c0_i32 : i32, i32
  }
  func.func @transform_1(%arg0: i32) -> (i32, i32) {
    %c0_i32 = arith.constant 0 : i32
    %c0_i32_0 = arith.constant 0 : i32
    %c0_i32_1 = arith.constant 0 : i32
    return %c0_i32, %c0_i32_0 : i32, i32
  }
  func.func @transform_2(%arg0: i32) -> (i32, i32) {
    %c0_i32 = arith.constant 0 : i32
    %c0_i32_0 = arith.constant 0 : i32
    %c0_i32_1 = arith.constant 0 : i32
    return %c0_i32, %c0_i32_0 : i32, i32
  }
  func.func @transform_3(%arg0: i32) -> (i32, i32) {
    %c0_i32 = arith.constant 0 : i32
    %c0_i32_0 = arith.constant 0 : i32
    %c0_i32_1 = arith.constant 0 : i32
    return %c0_i32, %c0_i32_0 : i32, i32
  }
  func.func @transform_4(%arg0: i32) -> (i32, i32) {
    %c0_i32 = arith.constant 0 : i32
    %c0_i32_0 = arith.constant 0 : i32
    %c0_i32_1 = arith.constant 0 : i32
    return %c0_i32, %c0_i32_0 : i32, i32
  }
  func.func @transform_5(%arg0: i32) -> (i32, i32) {
    %c0_i32 = arith.constant 0 : i32
    %c0_i32_0 = arith.constant 0 : i32
    return %arg0, %c0_i32 : i32, i32
  }
}

</mosaic_0001>

<llo_original>
// kernel: tpu_custom_call.1
$region0: #{tpu_custom_call.1}
  #allocation0 [shape = 'u32[]', space=smem, size = 0x4, offset = 0x4, fixed_abs, tag = 'smem constant byte address 0x4 - core index']
  #allocation1 [shape = 'u32[72,128]{1,0:T(1,128)}', space=vmem, size = 0x9000, scoped, tag = 'internal scratch']
  %s0 = inlined_call_operand.hbm [shape: f32[16,128], index: 0, kind: input, shape index: {}]
  %s1 = inlined_call_operand.hbm [shape: bf16[128,128], index: 1, kind: input, shape index: {}]
  %s2 = inlined_call_operand.vmem [shape: f32[1,128], index: 2, kind: input, shape index: {}]
  %s3 = inlined_call_operand.hbm [shape: bf16[128,128], index: 3, kind: input, shape index: {}]
  %s4 = inlined_call_operand.vmem [shape: f32[1,128], index: 4, kind: input, shape index: {}]
  %s5 = inlined_call_operand.hbm [shape: f32[16,128], index: 5, kind: output, shape index: {}]
  %s6 = sld [smem:[#allocation0]]
  $region42: #{tpu_custom_call.1} parent=0
    _
  %s8 = ssub.s32 1, %s6
  %s9 = scalar_select 0, %s8, %s6
  $region1: #{tpu_custom_call.1} parent=0
    #allocation2 [shape = 'u8[8192]{0}', space=vmem, size = 0x2000, scoped, tag = 'input window, operand 0, single buffered']
    #allocation3 [shape = 's32[1]{0}', space=sflag, size = 0x4, scoped, tag = 'scoped memory for tpu_custom_call.1']
    #allocation4 [shape = 's32[1]{0}', space=sflag, size = 0x4, scoped, tag = 'scoped memory for tpu_custom_call.1']
    #allocation5 [shape = 'u8[32768]{0}', space=vmem, size = 0x8000, scoped, tag = 'input window, operand 1, single buffered']
    #allocation6 [shape = 's32[1]{0}', space=sflag, size = 0x4, scoped, tag = 'scoped memory for tpu_custom_call.1']
    #allocation7 [shape = 'u8[32768]{0}', space=vmem, size = 0x8000, scoped, tag = 'input window, operand 3, single buffered']
    #allocation8 [shape = 'u8[8192]{0}', space=vmem, size = 0x2000, scoped, tag = 'output window, operand 0, single buffered']
    %10 = vsyncpa [#allocation3], 0
    %11 = vsyncpa [#allocation6], 0
    %12 = vsyncpa [#allocation4], 0
    // Predicated region
    $region2: #{tpu_custom_call.1} parent=1 // pred_check
      _
    $region3: #{tpu_custom_call.1} parent=1 // pred_check_branch
      %14 = sbr.rel (0) target = $region5
    $region4: #{tpu_custom_call.1} parent=1 // pred_region
      %16 = vsyncadd [#allocation3], 0
      %s17 = sshll.u32 %s0, 4
      %s18 = int_to_ptr.hbm [resolvable:$true] %s17
      %s19 = sshll.u32 [#allocation2], 4
      %s20 = int_to_ptr.vmem [resolvable:$true] %s19
      %25 = dma.hbm_to_vmem [thread:$0]  %s18, 256, %s20, [#allocation3], 128, 128, 8
    $region5: #{tpu_custom_call.1} parent=1 // pred_fallthru
      _
    // Predicated region
    $region6: #{tpu_custom_call.1} parent=1 // pred_check
      _
    $region7: #{tpu_custom_call.1} parent=1 // pred_check_branch
      %27 = sbr.rel (0) target = $region9
    $region8: #{tpu_custom_call.1} parent=1 // pred_region
      %29 = vsyncadd [#allocation6], 0
      %s30 = sshll.u32 %s1, 4
      %s31 = int_to_ptr.hbm [resolvable:$true] %s30
      %s32 = sshll.u32 [#allocation5], 4
      %s33 = int_to_ptr.vmem [resolvable:$true] %s32
      %38 = dma.hbm_to_vmem [thread:$0]  %s31, 1024, %s33, [#allocation6], 64, 64, 4
    $region9: #{tpu_custom_call.1} parent=1 // pred_fallthru
      _
    // Predicated region
    $region10: #{tpu_custom_call.1} parent=1 // pred_check
      _
    $region11: #{tpu_custom_call.1} parent=1 // pred_check_branch
      %40 = sbr.rel (0) target = $region13
    $region12: #{tpu_custom_call.1} parent=1 // pred_region
      _
    $region13: #{tpu_custom_call.1} parent=1 // pred_fallthru
      _
    // Predicated region
    $region14: #{tpu_custom_call.1} parent=1 // pred_check
      _
    $region15: #{tpu_custom_call.1} parent=1 // pred_check_branch
      %42 = sbr.rel (0) target = $region17
    $region16: #{tpu_custom_call.1} parent=1 // pred_region
      %44 = vsyncadd [#allocation6], 0
      %s45 = sshll.u32 %s3, 4
      %s46 = int_to_ptr.hbm [resolvable:$true] %s45
      %s47 = sshll.u32 [#allocation7], 4
      %s48 = int_to_ptr.vmem [resolvable:$true] %s47
      %53 = dma.hbm_to_vmem [thread:$0]  %s46, 1024, %s48, [#allocation6], 64, 64, 4
    $region17: #{tpu_custom_call.1} parent=1 // pred_fallthru
      _
    // Predicated region
    $region18: #{tpu_custom_call.1} parent=1 // pred_check
      _
    $region19: #{tpu_custom_call.1} parent=1 // pred_check_branch
      %55 = sbr.rel (0) target = $region21
    $region20: #{tpu_custom_call.1} parent=1 // pred_region
      _
    $region21: #{tpu_custom_call.1} parent=1 // pred_fallthru
      _
    // Predicated region
    $region22: #{tpu_custom_call.1} parent=1 // pred_check
      _
    $region23: #{tpu_custom_call.1} parent=1 // pred_check_branch
      %57 = sbr.rel (0) target = $region25
    $region24: #{tpu_custom_call.1} parent=1 // pred_region
      %59 = dma.done [#allocation3], 256
    $region25: #{tpu_custom_call.1} parent=1 // pred_fallthru
      _
    // Predicated region
    $region26: #{tpu_custom_call.1} parent=1 // pred_check
      _
    $region27: #{tpu_custom_call.1} parent=1 // pred_check_branch
      %61 = sbr.rel (0) target = $region29
    $region28: #{tpu_custom_call.1} parent=1 // pred_region
      %63 = dma.done [#allocation6], 1024
    $region29: #{tpu_custom_call.1} parent=1 // pred_fallthru
      _
    // Predicated region
    $region30: #{tpu_custom_call.1} parent=1 // pred_check
      _
    $region31: #{tpu_custom_call.1} parent=1 // pred_check_branch
      %65 = sbr.rel (0) target = $region33
    $region32: #{tpu_custom_call.1} parent=1 // pred_region
      %67 = dma.done [#allocation6], 1024
    $region33: #{tpu_custom_call.1} parent=1 // pred_fallthru
      _
    %v68 = vld [vmem:[#allocation2] sm:$0xff]
    %v69 = vld [vmem:[#allocation2 + $0x8] sm:$0xff]
    %v70 = vpack.c.bf16 %v69, %v68
    %v71 = vld [vmem:[#allocation5] sm:$0xf]
    %v72 = vld [vmem:[#allocation5 + $0x4] sm:$0xf]
    %v73 = vld [vmem:[#allocation5 + $0x8] sm:$0xf]
    %v74 = vld [vmem:[#allocation5 + $0xc] sm:$0xf]
    %v75 = vld [vmem:[#allocation5 + $0x10] sm:$0xf]
    %v76 = vld [vmem:[#allocation5 + $0x14] sm:$0xf]
    %v77 = vld [vmem:[#allocation5 + $0x18] sm:$0xf]
    %v78 = vld [vmem:[#allocation5 + $0x1c] sm:$0xf]
    %v79 = vld [vmem:[#allocation5 + $0x20] sm:$0xf]
    %v80 = vld [vmem:[#allocation5 + $0x24] sm:$0xf]
    %v81 = vld [vmem:[#allocation5 + $0x28] sm:$0xf]
    %v82 = vld [vmem:[#allocation5 + $0x2c] sm:$0xf]
    %v83 = vld [vmem:[#allocation5 + $0x30] sm:$0xf]
    %v84 = vld [vmem:[#allocation5 + $0x34] sm:$0xf]
    %v85 = vld [vmem:[#allocation5 + $0x38] sm:$0xf]
    %v86 = vld [vmem:[#allocation5 + $0x3c] sm:$0xf]
    %v87 = vld [vmem:[%s2] sm:$0x1]
    %v89 = vperm.slane %v87, 0
    %v107 = vunpack.c.l.b16 %v71
    %v108 = vunpack.c.l.b16 %v72
    %v109 = vunpack.c.l.b16 %v73
    %v110 = vunpack.c.l.b16 %v74
    %v111 = vunpack.c.l.b16 %v75
    %v112 = vunpack.c.l.b16 %v76
    %v113 = vunpack.c.l.b16 %v77
    %v114 = vunpack.c.l.b16 %v78
    %v115 = vunpack.c.l.b16 %v79
    %v116 = vunpack.c.l.b16 %v80
    %v117 = vunpack.c.l.b16 %v81
    %v118 = vunpack.c.l.b16 %v82
    %v119 = vunpack.c.l.b16 %v83
    %v120 = vunpack.c.l.b16 %v84
    %v121 = vunpack.c.l.b16 %v85
    %v122 = vunpack.c.l.b16 %v86
    %v123 = vpack.c.b16 %v108, %v107
    %v124 = vpack.c.b16 %v110, %v109
    %v125 = vpack.c.b16 %v112, %v111
    %v126 = vpack.c.b16 %v114, %v113
    %v127 = vpack.c.b16 %v116, %v115
    %v128 = vpack.c.b16 %v118, %v117
    %v129 = vpack.c.b16 %v120, %v119
    %v130 = vpack.c.b16 %v122, %v121
    %139 = vmatpush.bf16.msra.mxu0 %v130
    %140 = vmatpush.bf16.msra.mxu0 %v129
    %141 = vmatpush.bf16.msra.mxu0 %v128
    %142 = vmatpush.bf16.msra.mxu0 %v127
    %143 = vmatpush.bf16.msra.mxu0 %v126
    %144 = vmatpush.bf16.msra.mxu0 %v125
    %145 = vmatpush.bf16.msra.mxu0 %v124
    %146 = vmatpush.bf16.msra.mxu0 %v123
    %147 = vmatmul.bf16.gmra.mxu0 %v70
    %v148 = vpop.f32.mrf.mxu0
    %v149 = vadd.f32 %v89, %v148
    %v150 = vpop.f32.mrf.mxu0
    %v151 = vadd.f32 %v89, %v150
    %152 = vdwg.mxu0
    %v153 = vmax.f32 %v149, 0.0
    %v154 = vmax.f32 %v151, 0.0
    %v155 = vpack.c.bf16 %v154, %v153
    %v156 = vld [vmem:[#allocation7] sm:$0xf]
    %v157 = vld [vmem:[#allocation7 + $0x4] sm:$0xf]
    %v158 = vld [vmem:[#allocation7 + $0x8] sm:$0xf]
    %v159 = vld [vmem:[#allocation7 + $0xc] sm:$0xf]
    %v160 = vld [vmem:[#allocation7 + $0x10] sm:$0xf]
    %v161 = vld [vmem:[#allocation7 + $0x14] sm:$0xf]
    %v162 = vld [vmem:[#allocation7 + $0x18] sm:$0xf]
    %v163 = vld [vmem:[#allocation7 + $0x1c] sm:$0xf]
    %v164 = vld [vmem:[#allocation7 + $0x20] sm:$0xf]
    %v165 = vld [vmem:[#allocation7 + $0x24] sm:$0xf]
    %v166 = vld [vmem:[#allocation7 + $0x28] sm:$0xf]
    %v167 = vld [vmem:[#allocation7 + $0x2c] sm:$0xf]
    %v168 = vld [vmem:[#allocation7 + $0x30] sm:$0xf]
    %v169 = vld [vmem:[#allocation7 + $0x34] sm:$0xf]
    %v170 = vld [vmem:[#allocation7 + $0x38] sm:$0xf]
    %v171 = vld [vmem:[#allocation7 + $0x3c] sm:$0xf]
    %v172 = vld [vmem:[%s4] sm:$0x1]
    %v174 = vperm.slane %v172, 0
    %v192 = vunpack.c.l.b16 %v156
    %v193 = vunpack.c.l.b16 %v157
    %v194 = vunpack.c.l.b16 %v158
    %v195 = vunpack.c.l.b16 %v159
    %v196 = vunpack.c.l.b16 %v160
    %v197 = vunpack.c.l.b16 %v161
    %v198 = vunpack.c.l.b16 %v162
    %v199 = vunpack.c.l.b16 %v163
    %v200 = vunpack.c.l.b16 %v164
    %v201 = vunpack.c.l.b16 %v165
    %v202 = vunpack.c.l.b16 %v166
    %v203 = vunpack.c.l.b16 %v167
    %v204 = vunpack.c.l.b16 %v168
    %v205 = vunpack.c.l.b16 %v169
    %v206 = vunpack.c.l.b16 %v170
    %v207 = vunpack.c.l.b16 %v171
    %v208 = vpack.c.b16 %v193, %v192
    %v209 = vpack.c.b16 %v195, %v194
    %v210 = vpack.c.b16 %v197, %v196
    %v211 = vpack.c.b16 %v199, %v198
    %v212 = vpack.c.b16 %v201, %v200
    %v213 = vpack.c.b16 %v203, %v202
    %v214 = vpack.c.b16 %v205, %v204
    %v215 = vpack.c.b16 %v207, %v206
    %224 = vmatpush.bf16.msra.mxu0 %v215
    %225 = vmatpush.bf16.msra.mxu0 %v214
    %226 = vmatpush.bf16.msra.mxu0 %v213
    %227 = vmatpush.bf16.msra.mxu0 %v212
    %228 = vmatpush.bf16.msra.mxu0 %v211
    %229 = vmatpush.bf16.msra.mxu0 %v210
    %230 = vmatpush.bf16.msra.mxu0 %v209
    %231 = vmatpush.bf16.msra.mxu0 %v208
    %232 = vmatmul.bf16.gmra.mxu0 %v155
    %v233 = vpop.f32.mrf.mxu0
    %v234 = vadd.f32 %v174, %v233
    %v235 = vpop.f32.mrf.mxu0
    %v236 = vadd.f32 %v174, %v235
    %237 = vdwg.mxu0
    %238 = vst [vmem:[#allocation8] sm:$0xff] %v234
    %239 = vst [vmem:[#allocation8 + $0x8] sm:$0xff] %v236
    // Predicated region
    $region34: #{tpu_custom_call.1} parent=1 // pred_check
      _
    $region35: #{tpu_custom_call.1} parent=1 // pred_check_branch
      %241 = sbr.rel (0) target = $region37
    $region36: #{tpu_custom_call.1} parent=1 // pred_region
      %243 = vsyncadd [#allocation4], 0
      %s244 = sshll.u32 [#allocation8], 4
      %s245 = int_to_ptr.vmem [resolvable:$true] %s244
      %s246 = sshll.u32 %s5, 4
      %s247 = int_to_ptr.hbm [resolvable:$true] %s246
      %252 = dma.vmem_to_hbm [thread:$0]  %s245, 256, %s247, [#allocation4], 128, 128, 8
    $region37: #{tpu_custom_call.1} parent=1 // pred_fallthru
      _
    // Predicated region
    $region38: #{tpu_custom_call.1} parent=1 // pred_check
      _
    $region39: #{tpu_custom_call.1} parent=1 // pred_check_branch
      %254 = sbr.rel (0) target = $region41
    $region40: #{tpu_custom_call.1} parent=1 // pred_region
      %256 = dma.done [#allocation4], 256
    $region41: #{tpu_custom_call.1} parent=1 // pred_fallthru
      _
    %257 = vsyncpa [#allocation3], 1
    %258 = vsyncpa [#allocation6], 1
    %259 = vsyncpa [#allocation4], 1

</llo_original>
